<compile_context>
chip_gen: v6e
topology: v6e:2x2x1
jax: 0.10.0
libtpu: 0.0.40
codegen_flags: <defaults>
</compile_context>

<pallas_src>
import functools

import jax
import jax.numpy as jnp
from jax.experimental import pallas as pl
from jax.experimental.pallas import tpu as pltpu

_LANE = 128
_SUBLANE = 8

# Lazily feature-detected ONCE per process: does this jax/libtpu build accept
# pl.Buffered(1) single-buffering for grid-invariant operands?
_SINGLE_BUFFER_OK = None


def _round_up(x, m):
    return (x + m - 1) // m * m


# ---------------------------------------------------------------------------
# Hardware query: generation-aware VMEM budget / tiling preferences.
# ---------------------------------------------------------------------------
@functools.lru_cache(maxsize=None)
def _tpu_meta():
    """Returns (flavor, vmem_capacity_bytes) with conservative fallbacks."""
    kind = ""
    try:
        kind = jax.devices()[0].device_kind.lower()
    except Exception:
        pass
    if "v5 lite" in kind or "v5e" in kind or "v5lite" in kind:
        flavor = "v5e"
    elif "v7" in kind or "7x" in kind:
        flavor = "v7x"
    else:
        flavor = "v6e"          # v6e-class default (also v4/v5p: 128 MiB VMEM)

    phys_cap = (64 if flavor == "v7x" else 128) * 1024 * 1024
    vmem_cap = None
    try:
        info = pltpu.get_tpu_info()
        vmem_cap = int(getattr(info, "vmem_capacity_bytes", 0)) or None
    except Exception:
        vmem_cap = None
    if vmem_cap is None:
        vmem_cap = phys_cap
    return flavor, min(vmem_cap, phys_cap)


# ---------------------------------------------------------------------------
# Tile selection (VMEM-budget-aware, joint over M/N/K).
# ---------------------------------------------------------------------------
def _select_tiles(M, K, n_pad, *, x_isz, w_isz, out_isz, budget, flavor):
    """Pick (tile_m, tile_n, tile_k): prefer grid_k == 1, then grid_n == 1,
    then the largest VMEM-feasible M tile (>= 256 rows when possible)."""
    m_cap = min(M, 512 if flavor == "v7x" else 1024)

    n_units = n_pad // _LANE
    tn_cands = [u * _LANE for u in range(n_units, 0, -1) if n_units % u == 0]
    tk_cands = [K] + [m * _LANE for m in range(K // _LANE, 0, -1)
                      if m * _LANE < K and K % (m * _LANE) == 0]

    def fits(tm, tk, tn):
        x_b = 2 * tm * tk * x_isz          # x tile (double-buffered)
        w_b = 2 * 3 * tk * tn * w_isz      # stacked weight tile (count 2 bufs, safe)
        b_b = 2 * 3 * tn * 4               # biases
        o_b = 2 * tm * tn * out_isz        # output tile (double-buffered)
        a_b = 3 * tm * tn * 4              # f32 accumulator / live a,b,c values
        return x_b + w_b + b_b + o_b + a_b <= budget

    def pick_m(tk, tn, min_tm):
        cands = [t for t in range(_SUBLANE, m_cap + 1, _SUBLANE)
                 if t >= min_tm and M % t == 0 and fits(t, tk, tn)]
        if not cands:
            return None
        if flavor == "v7x":                # 2 TensorCores: prefer an even grid_m
            even = [t for t in cands if (M // t) % 2 == 0]
            if even:
                cands = even
        pref = 128 if flavor == "v5e" else 256     # MXU-native M alignment
        best = max(cands)
        aligned = [t for t in cands if t % pref == 0]
        if aligned and 2 * max(aligned) >= best:
            return max(aligned)
        return best

    # Pass 1 insists on a reasonably large M tile so each weight fetch is
    # amortized over many rows; pass 2 accepts anything that fits the budget.
    for min_tm in (min(M, 256), _SUBLANE):
        for tk in tk_cands:                # prefer grid_k == 1 (full K slab)
            for tn in tn_cands:            # then grid_n == 1 (full width)
                tm = pick_m(tk, tn, min_tm)
                if tm is not None:
                    return tm, tn, tk
    # Nothing fits even at minimum tiles: take the smallest legal tiling and
    # rely on the (raised) vmem limit.
    return _SUBLANE, _LANE, tk_cands[-1]


# ---------------------------------------------------------------------------
# Kernels.
# ---------------------------------------------------------------------------
def _kernel_direct(x_ref, w_ref, b_ref, o_ref):
    """grid_k == 1: single K pass, no accumulator round-trips."""
    x = x_ref[...]
    a = jnp.dot(x, w_ref[0], preferred_element_type=jnp.float32) + b_ref[0]
    b = jnp.dot(x, w_ref[1], preferred_element_type=jnp.float32) + b_ref[1]
    c = jnp.dot(x, w_ref[2], preferred_element_type=jnp.float32) + b_ref[2]
    # TODO(synk): activation / dropout / normalization hooks are None in the
    # reference config; insert them here if a concrete callable is required.
    o_ref[...] = (a * b + c).astype(o_ref.dtype)


def _kernel_ksplit(x_ref, w_ref, b_ref, o_ref, acc_ref):
    """grid_k > 1: resident f32 accumulator over the innermost K axis."""
    k = pl.program_id(2)

    @pl.when(k == 0)
    def _init():
        # Fold the biases into the accumulator init so the last K step only
        # has to do the a*b + c combine.
        for s in range(3):
            acc_ref[s] = jnp.broadcast_to(b_ref[s], acc_ref.shape[1:])

    x = x_ref[...]
    for s in range(3):
        acc_ref[s] += jnp.dot(x, w_ref[s], preferred_element_type=jnp.float32)

    @pl.when(k == pl.num_programs(2) - 1)
    def _finalize():
        o_ref[...] = (acc_ref[0] * acc_ref[1] + acc_ref[2]).astype(o_ref.dtype)


# ---------------------------------------------------------------------------
# Parameter preparation (hoisted out of the per-call hot path).
# ---------------------------------------------------------------------------
def prepare_params(wa, ba, wb, bb, wc, bc, *, compute_dtype=None):
    """One-time pad/stack of the three nn.Linear projections.

    wa/wb/wc : [in_width, neuro_num]   (pre-transposed torch weights W^T)
    ba/bb/bc : [neuro_num]
    Layout   : W[3, K, n_pad], B[3, 1, n_pad] with n_pad = round_up(N, 128),
               so any 128-multiple N tile covers the same column window of
               Wa/Wb/Wc and the a*b + c combine stays block-local.
    compute_dtype: e.g. jnp.bfloat16 on v6e/v7x for the bf16 MXU path
               (accumulation and the combine stay float32).
    """
    K, N = wa.shape
    n_pad = _round_up(max(N, _LANE), _LANE)
    # TODO(synk): for 3*N <= 128 the three projections could share one
    # 128-lane group (extracted with pltpu.roll) to cut the ~n_pad/N padding
    # waste; kept per-projection 128-padding for robustness.

    def pad_w(w):
        if compute_dtype is not None:
            w = w.astype(compute_dtype)
        return jnp.pad(w, ((0, 0), (0, n_pad - N)))

    def pad_b(b):
        return jnp.pad(b.astype(jnp.float32), (0, n_pad - N))

    w_stack = jnp.stack([pad_w(wa), pad_w(wb), pad_w(wc)], axis=0)   # [3, K, n_pad]
    b_stack = jnp.stack([pad_b(ba), pad_b(bb), pad_b(bc)], axis=0)   # [3, n_pad]
    b_stack = b_stack[:, None, :]                                    # [3, 1, n_pad]
    return {"w": w_stack, "b": b_stack, "k": K, "n": N, "n_pad": n_pad}


# ---------------------------------------------------------------------------
# Forward.
# ---------------------------------------------------------------------------
def bad_linear_transformer(x, wa=None, ba=None, wb=None, bb=None, wc=None, bc=None,
                           *, params=None, compute_dtype=None, interpret=False):
    """Fused BadLinearTransformer forward: (x@Wa+ba) * (x@Wb+bb) + (x@Wc+bc).

    Pass `params=prepare_params(...)` to keep the weight repack out of the
    per-call path; otherwise the raw wa/ba/wb/bb/wc/bc are repacked here.
    """
    global _SINGLE_BUFFER_OK

    if params is None:
        params = prepare_params(wa, ba, wb, bb, wc, bc, compute_dtype=compute_dtype)
    w, bias = params["w"], params["b"]
    K, N, n_pad = params["k"], params["n"], params["n_pad"]

    orig_shape = x.shape
    if orig_shape[-1] != K:
        raise ValueError(f"x last dim {orig_shape[-1]} != in_width {K}")
    out_dtype = x.dtype

    x2d = x.reshape(-1, K)
    M = x2d.shape[0]
    M_pad = _round_up(max(M, _SUBLANE), _SUBLANE)
    if M_pad != M:
        x2d = jnp.pad(x2d, ((0, M_pad - M), (0, 0)))
    if x2d.dtype != w.dtype:                 # weights define the MXU compute dtype
        x2d = x2d.astype(w.dtype)

    flavor, vmem_cap = _tpu_meta()
    budget = int(vmem_cap * 0.75)            # ~96 MiB v5e/v6e, ~48 MiB v7x
    vmem_limit = min(budget + (16 << 20), int(vmem_cap * 0.92))

    tile_m, tile_n, tile_k = _select_tiles(
        M_pad, K, n_pad,
        x_isz=jnp.dtype(x2d.dtype).itemsize,
        w_isz=jnp.dtype(w.dtype).itemsize,
        out_isz=jnp.dtype(out_dtype).itemsize,
        budget=budget, flavor=flavor)
    grid_m, grid_n, grid_k = M_pad // tile_m, n_pad // tile_n, K // tile_k

    cost = pl.CostEstimate(
        flops=2 * M_pad * K * 3 * n_pad + 2 * M_pad * n_pad,
        transcendentals=0,
        bytes_accessed=int(x2d.size * jnp.dtype(x2d.dtype).itemsize
                           + w.size * jnp.dtype(w.dtype).itemsize
                           + bias.size * 4
                           + M_pad * n_pad * jnp.dtype(out_dtype).itemsize))

    def _const_spec(shape, index_map, use_single):
        # Grid-invariant operands: a single pipeline buffer halves their VMEM
        # footprint (double-buffering constants is pure waste).
        if use_single and hasattr(pl, "Buffered"):
            try:
                return pl.BlockSpec(shape, index_map, pipeline_mode=pl.Buffered(1))
            except TypeError:
                pass
        return pl.BlockSpec(shape, index_map)

    def _call(use_single):
        if grid_k == 1:
            grid = (grid_m, grid_n)
            in_specs = [
                pl.BlockSpec((tile_m, tile_k), lambda i, j: (i, 0)),
                _const_spec((3, tile_k, tile_n), lambda i, j: (0, 0, j), use_single),
                _const_spec((3, 1, tile_n), lambda i, j: (0, 0, j), use_single),
            ]
            out_spec = pl.BlockSpec((tile_m, tile_n), lambda i, j: (i, j))
            scratch = ()
            kernel = _kernel_direct
            dims = ("parallel", "parallel")
        else:
            grid = (grid_m, grid_n, grid_k)
            in_specs = [
                pl.BlockSpec((tile_m, tile_k), lambda i, j, k: (i, k)),
                pl.BlockSpec((3, tile_k, tile_n), lambda i, j, k: (0, k, j)),
                pl.BlockSpec((3, 1, tile_n), lambda i, j, k: (0, 0, j)),
            ]
            out_spec = pl.BlockSpec((tile_m, tile_n), lambda i, j, k: (i, j))
            scratch = (pltpu.VMEM((3, tile_m, tile_n), jnp.float32),)
            kernel = _kernel_ksplit
            dims = ("parallel", "parallel", "arbitrary")

        return pl.pallas_call(
            kernel,
            out_shape=jax.ShapeDtypeStruct((M_pad, n_pad), out_dtype),
            grid_spec=pltpu.PrefetchScalarGridSpec(
                num_scalar_prefetch=0,
                grid=grid,
                in_specs=in_specs,
                out_specs=out_spec,
                scratch_shapes=scratch),
            compiler_params=pltpu.CompilerParams(
                dimension_semantics=dims,
                vmem_limit_bytes=vmem_limit),
            cost_estimate=cost,
            interpret=interpret,
        )(x2d, w, bias)

    want_single = (grid_k == 1 and grid_n == 1)   # weights/bias grid-invariant
    if not want_single or _SINGLE_BUFFER_OK is False:
        out_padded = _call(False)
    elif _SINGLE_BUFFER_OK:
        out_padded = _call(True)
    else:
        # One-time probe of pl.Buffered(1) support; a genuine (non-Buffered)
        # failure re-raises from the fallback call below.
        try:
            out_padded = _call(True)
            _SINGLE_BUFFER_OK = True
        except Exception:
            out_padded = _call(False)
            _SINGLE_BUFFER_OK = False

    out = out_padded[:M, :N]
    return out.reshape(*orig_shape[:-1], N)


def _reference(x, wa, ba, wb, bb, wc, bc):
    a = x @ wa + ba
    b = x @ wb + bb
    c = x @ wc + bc
    return a * b + c


if __name__ == "__main__":
    # Small shapes consistent with the module: batch=2, seq=8, in_width=32,
    # neuro_num=32  ->  x: [2, 8, 32]
    batch, seq, in_width, neuro_num = 2, 8, 32, 32

    key = jax.random.PRNGKey(0)
    kx, ka, kb, kc, kba, kbb, kbc = jax.random.split(key, 7)

    x = jax.random.normal(kx, (batch, seq, in_width), dtype=jnp.float32)

    # Deterministic "PyTorch-Linear-like" params, stored pre-transposed [K, N].
    scale = 1.0 / jnp.sqrt(in_width)
    wa = jax.random.uniform(ka, (in_width, neuro_num), jnp.float32, -scale, scale)
    wb = jax.random.uniform(kb, (in_width, neuro_num), jnp.float32, -scale, scale)
    wc = jax.random.uniform(kc, (in_width, neuro_num), jnp.float32, -scale, scale)
    ba = jax.random.uniform(kba, (neuro_num,), jnp.float32, -scale, scale)
    bb = jax.random.uniform(kbb, (neuro_num,), jnp.float32, -scale, scale)
    bc = jax.random.uniform(kbc, (neuro_num,), jnp.float32, -scale, scale)

    # One-off weight repack (hoisted out of the per-call hot path), then the
    # fused forward.  f32 compute so the tolerance check is exact; pass
    # compute_dtype=jnp.bfloat16 to prepare_params for the bf16 MXU path.
    params = prepare_params(wa, ba, wb, bb, wc, bc)
    out = bad_linear_transformer(x, params=params)
    out = jax.block_until_ready(out)

    ref = _reference(x, wa, ba, wb, bb, wc, bc)
    assert out.shape == (batch, seq, neuro_num), out.shape
    assert jnp.allclose(out, ref, atol=1e-5, rtol=1e-5), "mismatch vs reference"

    print("KERNEL_OK")
</pallas_src>

<mosaic_0001>
module attributes {stable_mosaic.version = 11 : i64} {
  func.func @_kernel_direct(%arg0: i32, %arg1: i32, %arg2: memref<16x32xf32, #tpu.memory_space<vmem>>, %arg3: memref<3x32x128xf32, #tpu.memory_space<vmem>>, %arg4: memref<3x1x128xf32, #tpu.memory_space<vmem>>, %arg5: memref<16x128xf32, #tpu.memory_space<vmem>>) attributes {dimension_semantics = [#tpu.dimension_semantics<parallel>, #tpu.dimension_semantics<parallel>], iteration_bounds = array<i64: 1, 1>, scalar_prefetch = 0 : i64, scratch_operands = 0 : i64, tpu.core_type = #tpu.core_type<tc>, window_params = [{transform_indices = @transform_0, window_bounds = array<i64: 16, 32>}, {pipeline_mode = #tpu.pipeline_mode<synchronous>, transform_indices = @transform_1, window_bounds = array<i64: 3, 32, 128>}, {pipeline_mode = #tpu.pipeline_mode<synchronous>, transform_indices = @transform_2, window_bounds = array<i64: 3, 1, 128>}, {transform_indices = @transform_3, window_bounds = array<i64: 16, 128>}]} {
    %c0 = arith.constant 0 : index
    %c0_0 = arith.constant 0 : index
    %0 = vector.load %arg2[%c0, %c0_0] : memref<16x32xf32, #tpu.memory_space<vmem>>, vector<16x32xf32>
    %c0_1 = arith.constant 0 : index
    %c0_2 = arith.constant 0 : index
    %c0_3 = arith.constant 0 : index
    %1 = vector.load %arg3[%c0_1, %c0_2, %c0_3] : memref<3x32x128xf32, #tpu.memory_space<vmem>>, vector<1x32x128xf32>
    %2 = vector.shape_cast %1 : vector<1x32x128xf32> to vector<32x128xf32>
    %cst = arith.constant dense<0.000000e+00> : vector<16x128xf32>
    %3 = tpu.matmul %0, %2, %cst {dimension_numbers = #tpu.dot_dimension_numbers<[1], [0], [0], [1], [0, 0, 1, 1], [], []>} : vector<16x32xf32>, vector<32x128xf32>, vector<16x128xf32> -> vector<16x128xf32>
    %c0_4 = arith.constant 0 : index
    %c0_5 = arith.constant 0 : index
    %c0_6 = arith.constant 0 : index
    %4 = vector.load %arg4[%c0_4, %c0_5, %c0_6] : memref<3x1x128xf32, #tpu.memory_space<vmem>>, vector<1x1x128xf32>
    %5 = vector.shape_cast %4 : vector<1x1x128xf32> to vector<1x128xf32>
    %6 = vector.broadcast %5 : vector<1x128xf32> to vector<16x128xf32>
    %7 = arith.addf %3, %6 : vector<16x128xf32>
    %c1 = arith.constant 1 : index
    %c0_7 = arith.constant 0 : index
    %c0_8 = arith.constant 0 : index
    %8 = vector.load %arg3[%c1, %c0_7, %c0_8] : memref<3x32x128xf32, #tpu.memory_space<vmem>>, vector<1x32x128xf32>
    %9 = vector.shape_cast %8 : vector<1x32x128xf32> to vector<32x128xf32>
    %cst_9 = arith.constant dense<0.000000e+00> : vector<16x128xf32>
    %10 = tpu.matmul %0, %9, %cst_9 {dimension_numbers = #tpu.dot_dimension_numbers<[1], [0], [0], [1], [0, 0, 1, 1], [], []>} : vector<16x32xf32>, vector<32x128xf32>, vector<16x128xf32> -> vector<16x128xf32>
    %c1_10 = arith.constant 1 : index
    %c0_11 = arith.constant 0 : index
    %c0_12 = arith.constant 0 : index
    %11 = vector.load %arg4[%c1_10, %c0_11, %c0_12] : memref<3x1x128xf32, #tpu.memory_space<vmem>>, vector<1x1x128xf32>
    %12 = vector.shape_cast %11 : vector<1x1x128xf32> to vector<1x128xf32>
    %13 = vector.broadcast %12 : vector<1x128xf32> to vector<16x128xf32>
    %14 = arith.addf %10, %13 : vector<16x128xf32>
    %c2 = arith.constant 2 : index
    %c0_13 = arith.constant 0 : index
    %c0_14 = arith.constant 0 : index
    %15 = vector.load %arg3[%c2, %c0_13, %c0_14] : memref<3x32x128xf32, #tpu.memory_space<vmem>>, vector<1x32x128xf32>
    %16 = vector.shape_cast %15 : vector<1x32x128xf32> to vector<32x128xf32>
    %cst_15 = arith.constant dense<0.000000e+00> : vector<16x128xf32>
    %17 = tpu.matmul %0, %16, %cst_15 {dimension_numbers = #tpu.dot_dimension_numbers<[1], [0], [0], [1], [0, 0, 1, 1], [], []>} : vector<16x32xf32>, vector<32x128xf32>, vector<16x128xf32> -> vector<16x128xf32>
    %c2_16 = arith.constant 2 : index
    %c0_17 = arith.constant 0 : index
    %c0_18 = arith.constant 0 : index
    %18 = vector.load %arg4[%c2_16, %c0_17, %c0_18] : memref<3x1x128xf32, #tpu.memory_space<vmem>>, vector<1x1x128xf32>
    %19 = vector.shape_cast %18 : vector<1x1x128xf32> to vector<1x128xf32>
    %20 = vector.broadcast %19 : vector<1x128xf32> to vector<16x128xf32>
    %21 = arith.addf %17, %20 : vector<16x128xf32>
    %22 = arith.mulf %7, %14 : vector<16x128xf32>
    %23 = arith.addf %22, %21 : vector<16x128xf32>
    %c0_19 = arith.constant 0 : index
    %c0_20 = arith.constant 0 : index
    %24 = vector.load %arg5[%c0_19, %c0_20] : memref<16x128xf32, #tpu.memory_space<vmem>>, vector<16x128xf32>
    tpu.vector_store %arg5[%c0_19, %c0_20], %23 {strides = array<i32>} : memref<16x128xf32, #tpu.memory_space<vmem>>, vector<16x128xf32>,
    return
  }
  func.func @transform_0(%arg0: i32, %arg1: i32) -> (i32, i32) {
    %c0_i32 = arith.constant 0 : i32
    %c0_i32_0 = arith.constant 0 : i32
    return %arg0, %c0_i32 : i32, i32
  }
  func.func @transform_1(%arg0: i32, %arg1: i32) -> (i32, i32, i32) {
    %c0_i32 = arith.constant 0 : i32
    %c0_i32_0 = arith.constant 0 : i32
    %c0_i32_1 = arith.constant 0 : i32
    return %c0_i32, %c0_i32_0, %arg1 : i32, i32, i32
  }
  func.func @transform_2(%arg0: i32, %arg1: i32) -> (i32, i32, i32) {
    %c0_i32 = arith.constant 0 : i32
    %c0_i32_0 = arith.constant 0 : i32
    %c0_i32_1 = arith.constant 0 : i32
    return %c0_i32, %c0_i32_0, %arg1 : i32, i32, i32
  }
  func.func @transform_3(%arg0: i32, %arg1: i32) -> (i32, i32) {
    %c0_i32 = arith.constant 0 : i32
    return %arg0, %arg1 : i32, i32
  }
}

module attributes {stable_mosaic.version = 11 : i64} {
  func.func @_kernel_direct(%arg0: i32, %arg1: i32, %arg2: memref<16x32xf32, #tpu.memory_space<vmem>>, %arg3: memref<3x32x128xf32, #tpu.memory_space<vmem>>, %arg4: memref<3x1x128xf32, #tpu.memory_space<vmem>>, %arg5: memref<16x128xf32, #tpu.memory_space<vmem>>) attributes {dimension_semantics = [#tpu.dimension_semantics<parallel>, #tpu.dimension_semantics<parallel>], iteration_bounds = array<i64: 1, 1>, scalar_prefetch = 0 : i64, scratch_operands = 0 : i64, tpu.core_type = #tpu.core_type<tc>, window_params = [{transform_indices = @transform_0, window_bounds = array<i64: 16, 32>}, {transform_indices = @transform_1, window_bounds = array<i64: 3, 32, 128>}, {transform_indices = @transform_2, window_bounds = array<i64: 3, 1, 128>}, {transform_indices = @transform_3, window_bounds = array<i64: 16, 128>}]} {
    %c0 = arith.constant 0 : index
    %c0_0 = arith.constant 0 : index
    %0 = vector.load %arg2[%c0, %c0_0] : memref<16x32xf32, #tpu.memory_space<vmem>>, vector<16x32xf32>
    %c0_1 = arith.constant 0 : index
    %c0_2 = arith.constant 0 : index
    %c0_3 = arith.constant 0 : index
    %1 = vector.load %arg3[%c0_1, %c0_2, %c0_3] : memref<3x32x128xf32, #tpu.memory_space<vmem>>, vector<1x32x128xf32>
    %2 = vector.shape_cast %1 : vector<1x32x128xf32> to vector<32x128xf32>
    %cst = arith.constant dense<0.000000e+00> : vector<16x128xf32>
    %3 = tpu.matmul %0, %2, %cst {dimension_numbers = #tpu.dot_dimension_numbers<[1], [0], [0], [1], [0, 0, 1, 1], [], []>} : vector<16x32xf32>, vector<32x128xf32>, vector<16x128xf32> -> vector<16x128xf32>
    %c0_4 = arith.constant 0 : index
    %c0_5 = arith.constant 0 : index
    %c0_6 = arith.constant 0 : index
    %4 = vector.load %arg4[%c0_4, %c0_5, %c0_6] : memref<3x1x128xf32, #tpu.memory_space<vmem>>, vector<1x1x128xf32>
    %5 = vector.shape_cast %4 : vector<1x1x128xf32> to vector<1x128xf32>
    %6 = vector.broadcast %5 : vector<1x128xf32> to vector<16x128xf32>
    %7 = arith.addf %3, %6 : vector<16x128xf32>
    %c1 = arith.constant 1 : index
    %c0_7 = arith.constant 0 : index
    %c0_8 = arith.constant 0 : index
    %8 = vector.load %arg3[%c1, %c0_7, %c0_8] : memref<3x32x128xf32, #tpu.memory_space<vmem>>, vector<1x32x128xf32>
    %9 = vector.shape_cast %8 : vector<1x32x128xf32> to vector<32x128xf32>
    %cst_9 = arith.constant dense<0.000000e+00> : vector<16x128xf32>
    %10 = tpu.matmul %0, %9, %cst_9 {dimension_numbers = #tpu.dot_dimension_numbers<[1], [0], [0], [1], [0, 0, 1, 1], [], []>} : vector<16x32xf32>, vector<32x128xf32>, vector<16x128xf32> -> vector<16x128xf32>
    %c1_10 = arith.constant 1 : index
    %c0_11 = arith.constant 0 : index
    %c0_12 = arith.constant 0 : index
    %11 = vector.load %arg4[%c1_10, %c0_11, %c0_12] : memref<3x1x128xf32, #tpu.memory_space<vmem>>, vector<1x1x128xf32>
    %12 = vector.shape_cast %11 : vector<1x1x128xf32> to vector<1x128xf32>
    %13 = vector.broadcast %12 : vector<1x128xf32> to vector<16x128xf32>
    %14 = arith.addf %10, %13 : vector<16x128xf32>
    %c2 = arith.constant 2 : index
    %c0_13 = arith.constant 0 : index
    %c0_14 = arith.constant 0 : index
    %15 = vector.load %arg3[%c2, %c0_13, %c0_14] : memref<3x32x128xf32, #tpu.memory_space<vmem>>, vector<1x32x128xf32>
    %16 = vector.shape_cast %15 : vector<1x32x128xf32> to vector<32x128xf32>
    %cst_15 = arith.constant dense<0.000000e+00> : vector<16x128xf32>
    %17 = tpu.matmul %0, %16, %cst_15 {dimension_numbers = #tpu.dot_dimension_numbers<[1], [0], [0], [1], [0, 0, 1, 1], [], []>} : vector<16x32xf32>, vector<32x128xf32>, vector<16x128xf32> -> vector<16x128xf32>
    %c2_16 = arith.constant 2 : index
    %c0_17 = arith.constant 0 : index
    %c0_18 = arith.constant 0 : index
    %18 = vector.load %arg4[%c2_16, %c0_17, %c0_18] : memref<3x1x128xf32, #tpu.memory_space<vmem>>, vector<1x1x128xf32>
    %19 = vector.shape_cast %18 : vector<1x1x128xf32> to vector<1x128xf32>
    %20 = vector.broadcast %19 : vector<1x128xf32> to vector<16x128xf32>
    %21 = arith.addf %17, %20 : vector<16x128xf32>
    %22 = arith.mulf %7, %14 : vector<16x128xf32>
    %23 = arith.addf %22, %21 : vector<16x128xf32>
    %c0_19 = arith.constant 0 : index
    %c0_20 = arith.constant 0 : index
    %24 = vector.load %arg5[%c0_19, %c0_20] : memref<16x128xf32, #tpu.memory_space<vmem>>, vector<16x128xf32>
    tpu.vector_store %arg5[%c0_19, %c0_20], %23 {strides = array<i32>} : memref<16x128xf32, #tpu.memory_space<vmem>>, vector<16x128xf32>,
    return
  }
  func.func @transform_0(%arg0: i32, %arg1: i32) -> (i32, i32) {
    %c0_i32 = arith.constant 0 : i32
    %c0_i32_0 = arith.constant 0 : i32
    return %arg0, %c0_i32 : i32, i32
  }
  func.func @transform_1(%arg0: i32, %arg1: i32) -> (i32, i32, i32) {
    %c0_i32 = arith.constant 0 : i32
    %c0_i32_0 = arith.constant 0 : i32
    %c0_i32_1 = arith.constant 0 : i32
    return %c0_i32, %c0_i32_0, %arg1 : i32, i32, i32
  }
  func.func @transform_2(%arg0: i32, %arg1: i32) -> (i32, i32, i32) {
    %c0_i32 = arith.constant 0 : i32
    %c0_i32_0 = arith.constant 0 : i32
    %c0_i32_1 = arith.constant 0 : i32
    return %c0_i32, %c0_i32_0, %arg1 : i32, i32, i32
  }
  func.func @transform_3(%arg0: i32, %arg1: i32) -> (i32, i32) {
    %c0_i32 = arith.constant 0 : i32
    return %arg0, %arg1 : i32, i32
  }
}

</mosaic_0001>

<llo_original>
// kernel: tpu_custom_call.1
$region0: #{tpu_custom_call.1}
  #allocation0 [shape = 'u32[]', space=smem, size = 0x4, offset = 0x4, fixed_abs, tag = 'smem constant byte address 0x4 - core index']
  #allocation1 [shape = 'u32[144,128]{1,0:T(1,128)}', space=vmem, size = 0x12000, scoped, tag = 'internal scratch']
  %s0 = inlined_call_operand.hbm [shape: f32[16,32], index: 0, kind: input, shape index: {}]
  %s1 = inlined_call_operand.hbm [shape: f32[3,32,128], index: 1, kind: input, shape index: {}]
  %s2 = inlined_call_operand.vmem [shape: f32[3,1,128], index: 2, kind: input, shape index: {}]
  %s3 = inlined_call_operand.hbm [shape: f32[16,128], index: 3, kind: output, shape index: {}]
  %s4 = sld [smem:[#allocation0]]
  $region30: #{tpu_custom_call.1} parent=0
    _
  %s6 = ssub.s32 1, %s4
  %s7 = scalar_select 0, %s6, %s4
  $region1: #{tpu_custom_call.1} parent=0
    #allocation2 [shape = 'u8[8192]{0}', space=vmem, size = 0x2000, scoped, tag = 'input window, operand 0, single buffered']
    #allocation3 [shape = 's32[1]{0}', space=sflag, size = 0x4, scoped, tag = 'scoped memory for tpu_custom_call.1']
    #allocation4 [shape = 's32[1]{0}', space=sflag, size = 0x4, scoped, tag = 'scoped memory for tpu_custom_call.1']
    #allocation5 [shape = 'u8[49152]{0}', space=vmem, size = 0xc000, scoped, tag = 'input window, operand 1, single buffered']
    #allocation6 [shape = 's32[1]{0}', space=sflag, size = 0x4, scoped, tag = 'scoped memory for tpu_custom_call.1']
    #allocation7 [shape = 'u8[8192]{0}', space=vmem, size = 0x2000, scoped, tag = 'output window, operand 0, single buffered']
    %8 = vsyncpa [#allocation3], 0
    %9 = vsyncpa [#allocation6], 0
    %10 = vsyncpa [#allocation4], 0
    // Predicated region
    $region2: #{tpu_custom_call.1} parent=1 // pred_check
      _
    $region3: #{tpu_custom_call.1} parent=1 // pred_check_branch
      %12 = sbr.rel (0) target = $region5
    $region4: #{tpu_custom_call.1} parent=1 // pred_region
      %s14 = ssub.s32 256, 256
      %15 = vsyncadd [#allocation3], %s14
      %s16 = sshll.u32 [#allocation2], 4
      %s17 = int_to_ptr.vmem [resolvable:$true] %s16
      %22 = dma.hbm_to_vmem [thread:$0]  %s0, 256, %s17, [#allocation3], 128, 128, 8
    $region5: #{tpu_custom_call.1} parent=1 // pred_fallthru
      _
    // Predicated region
    $region6: #{tpu_custom_call.1} parent=1 // pred_check
      _
    $region7: #{tpu_custom_call.1} parent=1 // pred_check_branch
      %24 = sbr.rel (0) target = $region9
    $region8: #{tpu_custom_call.1} parent=1 // pred_region
      %s26 = ssub.s32 1536, 1536
      %27 = vsyncadd [#allocation6], %s26
      %s28 = sshll.u32 [#allocation5], 4
      %s29 = int_to_ptr.vmem [resolvable:$true] %s28
      %34 = dma.hbm_to_vmem [thread:$0]  %s1, 1536, %s29, [#allocation6], 128, 128, 8
    $region9: #{tpu_custom_call.1} parent=1 // pred_fallthru
      _
    // Predicated region
    $region10: #{tpu_custom_call.1} parent=1 // pred_check
      _
    $region11: #{tpu_custom_call.1} parent=1 // pred_check_branch
      %36 = sbr.rel (0) target = $region13
    $region12: #{tpu_custom_call.1} parent=1 // pred_region
      _
    $region13: #{tpu_custom_call.1} parent=1 // pred_fallthru
      _
    // Predicated region
    $region14: #{tpu_custom_call.1} parent=1 // pred_check
      _
    $region15: #{tpu_custom_call.1} parent=1 // pred_check_branch
      %38 = sbr.rel (0) target = $region17
    $region16: #{tpu_custom_call.1} parent=1 // pred_region
      %39 = dma.done [#allocation3], 256
    $region17: #{tpu_custom_call.1} parent=1 // pred_fallthru
      _
    // Predicated region
    $region18: #{tpu_custom_call.1} parent=1 // pred_check
      _
    $region19: #{tpu_custom_call.1} parent=1 // pred_check_branch
      %41 = sbr.rel (0) target = $region21
    $region20: #{tpu_custom_call.1} parent=1 // pred_region
      %42 = dma.done [#allocation6], 1536
    $region21: #{tpu_custom_call.1} parent=1 // pred_fallthru
      _
    %v43 = vld [vmem:[#allocation2] sm:$0xff]
    %v44 = vld [vmem:[#allocation2 + $0x8] sm:$0xff]
    %v45 = vld [vmem:[#allocation5] sm:$0xff]
    %v46 = vld [vmem:[#allocation5 + $0x8] sm:$0xff]
    %v47 = vld [vmem:[#allocation5 + $0x10] sm:$0xff]
    %v48 = vld [vmem:[#allocation5 + $0x18] sm:$0xff]
    %v49 = vld [vmem:[%s2] sm:$0x1]
    %v51 = vlaneseq
    %v52 = vshrl.u32 %v51, 7
    %v53 = vsub.s32 0, %v52
    %v54 = vrot.slane %v49, %v53
    %vm56 = vcmask 261120
    %v58 = vsel %vm56, %v43, 0
    %v61 = vsel %vm56, %v44, 0
    %63 = vmatprep.subr.mxu0 0.0
    %64 = vmatpush1.msra.mxu0 0.0
    %65 = vmatprep.subr.mxu0 0.0
    %66 = vmatpush1.msra.mxu0 0.0
    %67 = vmatprep.subr.mxu0 0.0
    %68 = vmatpush1.msra.mxu0 0.0
    %69 = vmatprep.subr.mxu0 0.0
    %70 = vmatpush1.msra.mxu0 0.0
    %71 = vmatprep.subr.mxu0 0.0
    %72 = vmatpush1.msra.mxu0 0.0
    %73 = vmatprep.subr.mxu0 0.0
    %74 = vmatpush1.msra.mxu0 0.0
    %75 = vmatprep.subr.mxu0 0.0
    %76 = vmatpush1.msra.mxu0 0.0
    %77 = vmatprep.subr.mxu0 0.0
    %78 = vmatpush1.msra.mxu0 0.0
    %79 = vmatprep.subr.mxu0 0.0
    %80 = vmatpush1.msra.mxu0 0.0
    %81 = vmatprep.subr.mxu0 0.0
    %82 = vmatpush1.msra.mxu0 0.0
    %83 = vmatprep.subr.mxu0 0.0
    %84 = vmatpush1.msra.mxu0 0.0
    %85 = vmatprep.subr.mxu0 0.0
    %86 = vmatpush1.msra.mxu0 0.0
    %87 = vmatprep.subr.mxu0 0.0
    %88 = vmatpush1.msra.mxu0 %v48
    %89 = vmatprep.subr.mxu0 0.0
    %90 = vmatpush1.msra.mxu0 %v47
    %91 = vmatprep.subr.mxu0 0.0
    %92 = vmatpush1.msra.mxu0 %v46
    %93 = vmatprep.subr.mxu0 0.0
    %94 = vmatpush1.msra.mxu0 %v45
    %95 = vmatprep.subr.mxu0 0.0
    %96 = vmatpush2.msra.mxu0 0.0
    %97 = vmatprep.subr.mxu0 0.0
    %98 = vmatpush2.msra.mxu0 0.0
    %99 = vmatprep.subr.mxu0 0.0
    %100 = vmatpush2.msra.mxu0 0.0
    %101 = vmatprep.subr.mxu0 0.0
    %102 = vmatpush2.msra.mxu0 0.0
    %103 = vmatprep.subr.mxu0 0.0
    %104 = vmatpush2.msra.mxu0 0.0
    %105 = vmatprep.subr.mxu0 0.0
    %106 = vmatpush2.msra.mxu0 0.0
    %107 = vmatprep.subr.mxu0 0.0
    %108 = vmatpush2.msra.mxu0 0.0
    %109 = vmatprep.subr.mxu0 0.0
    %110 = vmatpush2.msra.mxu0 0.0
    %111 = vmatprep.subr.mxu0 0.0
    %112 = vmatpush2.msra.mxu0 0.0
    %113 = vmatprep.subr.mxu0 0.0
    %114 = vmatpush2.msra.mxu0 0.0
    %115 = vmatprep.subr.mxu0 0.0
    %116 = vmatpush2.msra.mxu0 0.0
    %117 = vmatprep.subr.mxu0 0.0
    %118 = vmatpush2.msra.mxu0 0.0
    %119 = vmatprep.subr.mxu0 0.0
    %120 = vmatpush2.msra.mxu0 0.0
    %121 = vmatprep.subr.mxu0 0.0
    %122 = vmatpush2.msra.mxu0 0.0
    %123 = vmatprep.subr.mxu0 0.0
    %124 = vmatpush2.msra.mxu0 0.0
    %125 = vmatprep.subr.mxu0 0.0
    %126 = vmatpush2.msra.mxu0 0.0
    %127 = vmatprep.mubr.f32.mxu0 0.0
    %128 = vmatmul.mubr.f32.gmra.mxu0 %v58
    %v129 = vpop.f32.mrf.mxu0
    %v130 = vadd.f32 %v54, %v129
    %v131 = vpop.f32.mrf.mxu0
    %132 = vmatprep.mubr.f32.mxu0 0.0
    %133 = vmatmul.mubr.f32.gmra.mxu0 %v61
    %v134 = vpop.f32.mrf.mxu0
    %v135 = vadd.f32 %v54, %v134
    %v136 = vpop.f32.mrf.mxu0
    %137 = vdwg.mxu0
    %s138 = scalar_lea.vmem [#allocation5], 32
    %v139 = vld [vmem:[%s138] sm:$0xff]
    %v140 = vld [vmem:[%s138 + $0x8] sm:$0xff]
    %v141 = vld [vmem:[%s138 + $0x10] sm:$0xff]
    %v142 = vld [vmem:[%s138 + $0x18] sm:$0xff]
    %s143 = scalar_lea.vmem %s2, 1
    %v144 = vld [vmem:[%s143] sm:$0x1]
    %v146 = vlaneseq
    %v147 = vshrl.u32 %v146, 7
    %v148 = vsub.s32 0, %v147
    %v149 = vrot.slane %v144, %v148
    %151 = vmatprep.subr.mxu0 0.0
    %152 = vmatpush1.msra.mxu0 0.0
    %153 = vmatprep.subr.mxu0 0.0
    %154 = vmatpush1.msra.mxu0 0.0
    %155 = vmatprep.subr.mxu0 0.0
    %156 = vmatpush1.msra.mxu0 0.0
    %157 = vmatprep.subr.mxu0 0.0
    %158 = vmatpush1.msra.mxu0 0.0
    %159 = vmatprep.subr.mxu0 0.0
    %160 = vmatpush1.msra.mxu0 0.0
    %161 = vmatprep.subr.mxu0 0.0
    %162 = vmatpush1.msra.mxu0 0.0
    %163 = vmatprep.subr.mxu0 0.0
    %164 = vmatpush1.msra.mxu0 0.0
    %165 = vmatprep.subr.mxu0 0.0
    %166 = vmatpush1.msra.mxu0 0.0
    %167 = vmatprep.subr.mxu0 0.0
    %168 = vmatpush1.msra.mxu0 0.0
    %169 = vmatprep.subr.mxu0 0.0
    %170 = vmatpush1.msra.mxu0 0.0
    %171 = vmatprep.subr.mxu0 0.0
    %172 = vmatpush1.msra.mxu0 0.0
    %173 = vmatprep.subr.mxu0 0.0
    %174 = vmatpush1.msra.mxu0 0.0
    %175 = vmatprep.subr.mxu0 0.0
    %176 = vmatpush1.msra.mxu0 %v142
    %177 = vmatprep.subr.mxu0 0.0
    %178 = vmatpush1.msra.mxu0 %v141
    %179 = vmatprep.subr.mxu0 0.0
    %180 = vmatpush1.msra.mxu0 %v140
    %181 = vmatprep.subr.mxu0 0.0
    %182 = vmatpush1.msra.mxu0 %v139
    %183 = vmatprep.subr.mxu0 0.0
    %184 = vmatpush2.msra.mxu0 0.0
    %185 = vmatprep.subr.mxu0 0.0
    %186 = vmatpush2.msra.mxu0 0.0
    %187 = vmatprep.subr.mxu0 0.0
    %188 = vmatpush2.msra.mxu0 0.0
    %189 = vmatprep.subr.mxu0 0.0
    %190 = vmatpush2.msra.mxu0 0.0
    %191 = vmatprep.subr.mxu0 0.0
    %192 = vmatpush2.msra.mxu0 0.0
    %193 = vmatprep.subr.mxu0 0.0
    %194 = vmatpush2.msra.mxu0 0.0
    %195 = vmatprep.subr.mxu0 0.0
    %196 = vmatpush2.msra.mxu0 0.0
    %197 = vmatprep.subr.mxu0 0.0
    %198 = vmatpush2.msra.mxu0 0.0
    %199 = vmatprep.subr.mxu0 0.0
    %200 = vmatpush2.msra.mxu0 0.0
    %201 = vmatprep.subr.mxu0 0.0
    %202 = vmatpush2.msra.mxu0 0.0
    %203 = vmatprep.subr.mxu0 0.0
    %204 = vmatpush2.msra.mxu0 0.0
    %205 = vmatprep.subr.mxu0 0.0
    %206 = vmatpush2.msra.mxu0 0.0
    %207 = vmatprep.subr.mxu0 0.0
    %208 = vmatpush2.msra.mxu0 0.0
    %209 = vmatprep.subr.mxu0 0.0
    %210 = vmatpush2.msra.mxu0 0.0
    %211 = vmatprep.subr.mxu0 0.0
    %212 = vmatpush2.msra.mxu0 0.0
    %213 = vmatprep.subr.mxu0 0.0
    %214 = vmatpush2.msra.mxu0 0.0
    %215 = vmatprep.mubr.f32.mxu0 0.0
    %216 = vmatmul.mubr.f32.gmra.mxu0 %v58
    %v217 = vpop.f32.mrf.mxu0
    %v218 = vadd.f32 %v149, %v217
    %v219 = vpop.f32.mrf.mxu0
    %220 = vmatprep.mubr.f32.mxu0 0.0
    %221 = vmatmul.mubr.f32.gmra.mxu0 %v61
    %v222 = vpop.f32.mrf.mxu0
    %v223 = vadd.f32 %v149, %v222
    %v224 = vpop.f32.mrf.mxu0
    %225 = vdwg.mxu0
    %s226 = scalar_lea.vmem [#allocation5], 64
    %v227 = vld [vmem:[%s226] sm:$0xff]
    %v228 = vld [vmem:[%s226 + $0x8] sm:$0xff]
    %v229 = vld [vmem:[%s226 + $0x10] sm:$0xff]
    %v230 = vld [vmem:[%s226 + $0x18] sm:$0xff]
    %s231 = scalar_lea.vmem %s2, 2
    %v232 = vld [vmem:[%s231] sm:$0x1]
    %v234 = vlaneseq
    %v235 = vshrl.u32 %v234, 7
    %v236 = vsub.s32 0, %v235
    %v237 = vrot.slane %v232, %v236
    %239 = vmatprep.subr.mxu0 0.0
    %240 = vmatpush1.msra.mxu0 0.0
    %241 = vmatprep.subr.mxu0 0.0
    %242 = vmatpush1.msra.mxu0 0.0
    %243 = vmatprep.subr.mxu0 0.0
    %244 = vmatpush1.msra.mxu0 0.0
    %245 = vmatprep.subr.mxu0 0.0
    %246 = vmatpush1.msra.mxu0 0.0
    %247 = vmatprep.subr.mxu0 0.0
    %248 = vmatpush1.msra.mxu0 0.0
    %249 = vmatprep.subr.mxu0 0.0
    %250 = vmatpush1.msra.mxu0 0.0
    %251 = vmatprep.subr.mxu0 0.0
    %252 = vmatpush1.msra.mxu0 0.0
    %253 = vmatprep.subr.mxu0 0.0
    %254 = vmatpush1.msra.mxu0 0.0
    %255 = vmatprep.subr.mxu0 0.0
    %256 = vmatpush1.msra.mxu0 0.0
    %257 = vmatprep.subr.mxu0 0.0
    %258 = vmatpush1.msra.mxu0 0.0
    %259 = vmatprep.subr.mxu0 0.0
    %260 = vmatpush1.msra.mxu0 0.0
    %261 = vmatprep.subr.mxu0 0.0
    %262 = vmatpush1.msra.mxu0 0.0
    %263 = vmatprep.subr.mxu0 0.0
    %264 = vmatpush1.msra.mxu0 %v230
    %265 = vmatprep.subr.mxu0 0.0
    %266 = vmatpush1.msra.mxu0 %v229
    %267 = vmatprep.subr.mxu0 0.0
    %268 = vmatpush1.msra.mxu0 %v228
    %269 = vmatprep.subr.mxu0 0.0
    %270 = vmatpush1.msra.mxu0 %v227
    %271 = vmatprep.subr.mxu0 0.0
    %272 = vmatpush2.msra.mxu0 0.0
    %273 = vmatprep.subr.mxu0 0.0
    %274 = vmatpush2.msra.mxu0 0.0
    %275 = vmatprep.subr.mxu0 0.0
    %276 = vmatpush2.msra.mxu0 0.0
    %277 = vmatprep.subr.mxu0 0.0
    %278 = vmatpush2.msra.mxu0 0.0
    %279 = vmatprep.subr.mxu0 0.0
    %280 = vmatpush2.msra.mxu0 0.0
    %281 = vmatprep.subr.mxu0 0.0
    %282 = vmatpush2.msra.mxu0 0.0
    %283 = vmatprep.subr.mxu0 0.0
    %284 = vmatpush2.msra.mxu0 0.0
    %285 = vmatprep.subr.mxu0 0.0
    %286 = vmatpush2.msra.mxu0 0.0
    %287 = vmatprep.subr.mxu0 0.0
    %288 = vmatpush2.msra.mxu0 0.0
    %289 = vmatprep.subr.mxu0 0.0
    %290 = vmatpush2.msra.mxu0 0.0
    %291 = vmatprep.subr.mxu0 0.0
    %292 = vmatpush2.msra.mxu0 0.0
    %293 = vmatprep.subr.mxu0 0.0
    %294 = vmatpush2.msra.mxu0 0.0
    %295 = vmatprep.subr.mxu0 0.0
    %296 = vmatpush2.msra.mxu0 0.0
    %297 = vmatprep.subr.mxu0 0.0
    %298 = vmatpush2.msra.mxu0 0.0
    %299 = vmatprep.subr.mxu0 0.0
    %300 = vmatpush2.msra.mxu0 0.0
    %301 = vmatprep.subr.mxu0 0.0
    %302 = vmatpush2.msra.mxu0 0.0
    %303 = vmatprep.mubr.f32.mxu0 0.0
    %304 = vmatmul.mubr.f32.gmra.mxu0 %v58
    %v305 = vpop.f32.mrf.mxu0
    %v306 = vadd.f32 %v237, %v305
    %v307 = vpop.f32.mrf.mxu0
    %308 = vmatprep.mubr.f32.mxu0 0.0
    %309 = vmatmul.mubr.f32.gmra.mxu0 %v61
    %v310 = vpop.f32.mrf.mxu0
    %v311 = vadd.f32 %v237, %v310
    %v312 = vpop.f32.mrf.mxu0
    %313 = vdwg.mxu0
    %v314 = vmul.f32 %v130, %v218
    %v315 = vmul.f32 %v135, %v223
    %v316 = vadd.f32 %v314, %v306
    %v317 = vadd.f32 %v315, %v311
    %318 = vst [vmem:[#allocation7] sm:$0xff] %v316
    %319 = vst [vmem:[#allocation7 + $0x8] sm:$0xff] %v317
    // Predicated region
    $region22: #{tpu_custom_call.1} parent=1 // pred_check
      _
    $region23: #{tpu_custom_call.1} parent=1 // pred_check_branch
      %321 = sbr.rel (0) target = $region25
    $region24: #{tpu_custom_call.1} parent=1 // pred_region
      %s323 = ssub.s32 256, 256
      %324 = vsyncadd [#allocation4], %s323
      %s325 = sshll.u32 [#allocation7], 4
      %s326 = int_to_ptr.vmem [resolvable:$true] %s325
      %331 = dma.vmem_to_hbm [thread:$0]  %s326, 256, %s3, [#allocation4], 128, 128, 8
    $region25: #{tpu_custom_call.1} parent=1 // pred_fallthru
      _
    // Predicated region
    $region26: #{tpu_custom_call.1} parent=1 // pred_check
      _
    $region27: #{tpu_custom_call.1} parent=1 // pred_check_branch
      %333 = sbr.rel (0) target = $region29
    $region28: #{tpu_custom_call.1} parent=1 // pred_region
      %334 = dma.done [#allocation4], 256
    $region29: #{tpu_custom_call.1} parent=1 // pred_fallthru
      _
    %335 = vsyncpa [#allocation3], 1
    %336 = vsyncpa [#allocation6], 1
    %337 = vsyncpa [#allocation4], 1

// kernel: tpu_custom_call.1
$region0: #{tpu_custom_call.1}
  #allocation0 [shape = 'u32[]', space=smem, size = 0x4, offset = 0x4, fixed_abs, tag = 'smem constant byte address 0x4 - core index']
  #allocation1 [shape = 'u32[144,128]{1,0:T(1,128)}', space=vmem, size = 0x12000, scoped, tag = 'internal scratch']
  %s0 = inlined_call_operand.hbm [shape: f32[16,32], index: 0, kind: input, shape index: {}]
  %s1 = inlined_call_operand.hbm [shape: f32[3,32,128], index: 1, kind: input, shape index: {}]
  %s2 = inlined_call_operand.vmem [shape: f32[3,1,128], index: 2, kind: input, shape index: {}]
  %s3 = inlined_call_operand.hbm [shape: f32[16,128], index: 3, kind: output, shape index: {}]
  %s4 = sld [smem:[#allocation0]]
  $region30: #{tpu_custom_call.1} parent=0
    _
  %s6 = ssub.s32 1, %s4
  %s7 = scalar_select 0, %s6, %s4
  $region1: #{tpu_custom_call.1} parent=0
    #allocation2 [shape = 'u8[8192]{0}', space=vmem, size = 0x2000, scoped, tag = 'input window, operand 0, single buffered']
    #allocation3 [shape = 's32[1]{0}', space=sflag, size = 0x4, scoped, tag = 'scoped memory for tpu_custom_call.1']
    #allocation4 [shape = 's32[1]{0}', space=sflag, size = 0x4, scoped, tag = 'scoped memory for tpu_custom_call.1']
    #allocation5 [shape = 'u8[49152]{0}', space=vmem, size = 0xc000, scoped, tag = 'input window, operand 1, single buffered']
    #allocation6 [shape = 's32[1]{0}', space=sflag, size = 0x4, scoped, tag = 'scoped memory for tpu_custom_call.1']
    #allocation7 [shape = 'u8[8192]{0}', space=vmem, size = 0x2000, scoped, tag = 'output window, operand 0, single buffered']
    %8 = vsyncpa [#allocation3], 0
    %9 = vsyncpa [#allocation6], 0
    %10 = vsyncpa [#allocation4], 0
    // Predicated region
    $region2: #{tpu_custom_call.1} parent=1 // pred_check
      _
    $region3: #{tpu_custom_call.1} parent=1 // pred_check_branch
      %12 = sbr.rel (0) target = $region5
    $region4: #{tpu_custom_call.1} parent=1 // pred_region
      %s14 = ssub.s32 256, 256
      %15 = vsyncadd [#allocation3], %s14
      %s16 = sshll.u32 [#allocation2], 4
      %s17 = int_to_ptr.vmem [resolvable:$true] %s16
      %22 = dma.hbm_to_vmem [thread:$0]  %s0, 256, %s17, [#allocation3], 128, 128, 8
    $region5: #{tpu_custom_call.1} parent=1 // pred_fallthru
      _
    // Predicated region
    $region6: #{tpu_custom_call.1} parent=1 // pred_check
      _
    $region7: #{tpu_custom_call.1} parent=1 // pred_check_branch
      %24 = sbr.rel (0) target = $region9
    $region8: #{tpu_custom_call.1} parent=1 // pred_region
      %s26 = ssub.s32 1536, 1536
      %27 = vsyncadd [#allocation6], %s26
      %s28 = sshll.u32 [#allocation5], 4
      %s29 = int_to_ptr.vmem [resolvable:$true] %s28
      %34 = dma.hbm_to_vmem [thread:$0]  %s1, 1536, %s29, [#allocation6], 128, 128, 8
    $region9: #{tpu_custom_call.1} parent=1 // pred_fallthru
      _
    // Predicated region
    $region10: #{tpu_custom_call.1} parent=1 // pred_check
      _
    $region11: #{tpu_custom_call.1} parent=1 // pred_check_branch
      %36 = sbr.rel (0) target = $region13
    $region12: #{tpu_custom_call.1} parent=1 // pred_region
      _
    $region13: #{tpu_custom_call.1} parent=1 // pred_fallthru
      _
    // Predicated region
    $region14: #{tpu_custom_call.1} parent=1 // pred_check
      _
    $region15: #{tpu_custom_call.1} parent=1 // pred_check_branch
      %38 = sbr.rel (0) target = $region17
    $region16: #{tpu_custom_call.1} parent=1 // pred_region
      %39 = dma.done [#allocation3], 256
    $region17: #{tpu_custom_call.1} parent=1 // pred_fallthru
      _
    // Predicated region
    $region18: #{tpu_custom_call.1} parent=1 // pred_check
      _
    $region19: #{tpu_custom_call.1} parent=1 // pred_check_branch
      %41 = sbr.rel (0) target = $region21
    $region20: #{tpu_custom_call.1} parent=1 // pred_region
      %42 = dma.done [#allocation6], 1536
    $region21: #{tpu_custom_call.1} parent=1 // pred_fallthru
      _
    %v43 = vld [vmem:[#allocation2] sm:$0xff]
    %v44 = vld [vmem:[#allocation2 + $0x8] sm:$0xff]
    %v45 = vld [vmem:[#allocation5] sm:$0xff]
    %v46 = vld [vmem:[#allocation5 + $0x8] sm:$0xff]
    %v47 = vld [vmem:[#allocation5 + $0x10] sm:$0xff]
    %v48 = vld [vmem:[#allocation5 + $0x18] sm:$0xff]
    %v49 = vld [vmem:[%s2] sm:$0x1]
    %v51 = vlaneseq
    %v52 = vshrl.u32 %v51, 7
    %v53 = vsub.s32 0, %v52
    %v54 = vrot.slane %v49, %v53
    %vm56 = vcmask 261120
    %v58 = vsel %vm56, %v43, 0
    %v61 = vsel %vm56, %v44, 0
    %63 = vmatprep.subr.mxu0 0.0
    %64 = vmatpush1.msra.mxu0 0.0
    %65 = vmatprep.subr.mxu0 0.0
    %66 = vmatpush1.msra.mxu0 0.0
    %67 = vmatprep.subr.mxu0 0.0
    %68 = vmatpush1.msra.mxu0 0.0
    %69 = vmatprep.subr.mxu0 0.0
    %70 = vmatpush1.msra.mxu0 0.0
    %71 = vmatprep.subr.mxu0 0.0
    %72 = vmatpush1.msra.mxu0 0.0
    %73 = vmatprep.subr.mxu0 0.0
    %74 = vmatpush1.msra.mxu0 0.0
    %75 = vmatprep.subr.mxu0 0.0
    %76 = vmatpush1.msra.mxu0 0.0
    %77 = vmatprep.subr.mxu0 0.0
    %78 = vmatpush1.msra.mxu0 0.0
    %79 = vmatprep.subr.mxu0 0.0
    %80 = vmatpush1.msra.mxu0 0.0
    %81 = vmatprep.subr.mxu0 0.0
    %82 = vmatpush1.msra.mxu0 0.0
    %83 = vmatprep.subr.mxu0 0.0
    %84 = vmatpush1.msra.mxu0 0.0
    %85 = vmatprep.subr.mxu0 0.0
    %86 = vmatpush1.msra.mxu0 0.0
    %87 = vmatprep.subr.mxu0 0.0
    %88 = vmatpush1.msra.mxu0 %v48
    %89 = vmatprep.subr.mxu0 0.0
    %90 = vmatpush1.msra.mxu0 %v47
    %91 = vmatprep.subr.mxu0 0.0
    %92 = vmatpush1.msra.mxu0 %v46
    %93 = vmatprep.subr.mxu0 0.0
    %94 = vmatpush1.msra.mxu0 %v45
    %95 = vmatprep.subr.mxu0 0.0
    %96 = vmatpush2.msra.mxu0 0.0
    %97 = vmatprep.subr.mxu0 0.0
    %98 = vmatpush2.msra.mxu0 0.0
    %99 = vmatprep.subr.mxu0 0.0
    %100 = vmatpush2.msra.mxu0 0.0
    %101 = vmatprep.subr.mxu0 0.0
    %102 = vmatpush2.msra.mxu0 0.0
    %103 = vmatprep.subr.mxu0 0.0
    %104 = vmatpush2.msra.mxu0 0.0
    %105 = vmatprep.subr.mxu0 0.0
    %106 = vmatpush2.msra.mxu0 0.0
    %107 = vmatprep.subr.mxu0 0.0
    %108 = vmatpush2.msra.mxu0 0.0
    %109 = vmatprep.subr.mxu0 0.0
    %110 = vmatpush2.msra.mxu0 0.0
    %111 = vmatprep.subr.mxu0 0.0
    %112 = vmatpush2.msra.mxu0 0.0
    %113 = vmatprep.subr.mxu0 0.0
    %114 = vmatpush2.msra.mxu0 0.0
    %115 = vmatprep.subr.mxu0 0.0
    %116 = vmatpush2.msra.mxu0 0.0
    %117 = vmatprep.subr.mxu0 0.0
    %118 = vmatpush2.msra.mxu0 0.0
    %119 = vmatprep.subr.mxu0 0.0
    %120 = vmatpush2.msra.mxu0 0.0
    %121 = vmatprep.subr.mxu0 0.0
    %122 = vmatpush2.msra.mxu0 0.0
    %123 = vmatprep.subr.mxu0 0.0
    %124 = vmatpush2.msra.mxu0 0.0
    %125 = vmatprep.subr.mxu0 0.0
    %126 = vmatpush2.msra.mxu0 0.0
    %127 = vmatprep.mubr.f32.mxu0 0.0
    %128 = vmatmul.mubr.f32.gmra.mxu0 %v58
    %v129 = vpop.f32.mrf.mxu0
    %v130 = vadd.f32 %v54, %v129
    %v131 = vpop.f32.mrf.mxu0
    %132 = vmatprep.mubr.f32.mxu0 0.0
    %133 = vmatmul.mubr.f32.gmra.mxu0 %v61
    %v134 = vpop.f32.mrf.mxu0
    %v135 = vadd.f32 %v54, %v134
    %v136 = vpop.f32.mrf.mxu0
    %137 = vdwg.mxu0
    %s138 = scalar_lea.vmem [#allocation5], 32
    %v139 = vld [vmem:[%s138] sm:$0xff]
    %v140 = vld [vmem:[%s138 + $0x8] sm:$0xff]
    %v141 = vld [vmem:[%s138 + $0x10] sm:$0xff]
    %v142 = vld [vmem:[%s138 + $0x18] sm:$0xff]
    %s143 = scalar_lea.vmem %s2, 1
    %v144 = vld [vmem:[%s143] sm:$0x1]
    %v146 = vlaneseq
    %v147 = vshrl.u32 %v146, 7
    %v148 = vsub.s32 0, %v147
    %v149 = vrot.slane %v144, %v148
    %151 = vmatprep.subr.mxu0 0.0
    %152 = vmatpush1.msra.mxu0 0.0
    %153 = vmatprep.subr.mxu0 0.0
    %154 = vmatpush1.msra.mxu0 0.0
    %155 = vmatprep.subr.mxu0 0.0
    %156 = vmatpush1.msra.mxu0 0.0
    %157 = vmatprep.subr.mxu0 0.0
    %158 = vmatpush1.msra.mxu0 0.0
    %159 = vmatprep.subr.mxu0 0.0
    %160 = vmatpush1.msra.mxu0 0.0
    %161 = vmatprep.subr.mxu0 0.0
    %162 = vmatpush1.msra.mxu0 0.0
    %163 = vmatprep.subr.mxu0 0.0
    %164 = vmatpush1.msra.mxu0 0.0
    %165 = vmatprep.subr.mxu0 0.0
    %166 = vmatpush1.msra.mxu0 0.0
    %167 = vmatprep.subr.mxu0 0.0
    %168 = vmatpush1.msra.mxu0 0.0
    %169 = vmatprep.subr.mxu0 0.0
    %170 = vmatpush1.msra.mxu0 0.0
    %171 = vmatprep.subr.mxu0 0.0
    %172 = vmatpush1.msra.mxu0 0.0
    %173 = vmatprep.subr.mxu0 0.0
    %174 = vmatpush1.msra.mxu0 0.0
    %175 = vmatprep.subr.mxu0 0.0
    %176 = vmatpush1.msra.mxu0 %v142
    %177 = vmatprep.subr.mxu0 0.0
    %178 = vmatpush1.msra.mxu0 %v141
    %179 = vmatprep.subr.mxu0 0.0
    %180 = vmatpush1.msra.mxu0 %v140
    %181 = vmatprep.subr.mxu0 0.0
    %182 = vmatpush1.msra.mxu0 %v139
    %183 = vmatprep.subr.mxu0 0.0
    %184 = vmatpush2.msra.mxu0 0.0
    %185 = vmatprep.subr.mxu0 0.0
    %186 = vmatpush2.msra.mxu0 0.0
    %187 = vmatprep.subr.mxu0 0.0
    %188 = vmatpush2.msra.mxu0 0.0
    %189 = vmatprep.subr.mxu0 0.0
    %190 = vmatpush2.msra.mxu0 0.0
    %191 = vmatprep.subr.mxu0 0.0
    %192 = vmatpush2.msra.mxu0 0.0
    %193 = vmatprep.subr.mxu0 0.0
    %194 = vmatpush2.msra.mxu0 0.0
    %195 = vmatprep.subr.mxu0 0.0
    %196 = vmatpush2.msra.mxu0 0.0
    %197 = vmatprep.subr.mxu0 0.0
    %198 = vmatpush2.msra.mxu0 0.0
    %199 = vmatprep.subr.mxu0 0.0
    %200 = vmatpush2.msra.mxu0 0.0
    %201 = vmatprep.subr.mxu0 0.0
    %202 = vmatpush2.msra.mxu0 0.0
    %203 = vmatprep.subr.mxu0 0.0
    %204 = vmatpush2.msra.mxu0 0.0
    %205 = vmatprep.subr.mxu0 0.0
    %206 = vmatpush2.msra.mxu0 0.0
    %207 = vmatprep.subr.mxu0 0.0
    %208 = vmatpush2.msra.mxu0 0.0
    %209 = vmatprep.subr.mxu0 0.0
    %210 = vmatpush2.msra.mxu0 0.0
    %211 = vmatprep.subr.mxu0 0.0
    %212 = vmatpush2.msra.mxu0 0.0
    %213 = vmatprep.subr.mxu0 0.0
    %214 = vmatpush2.msra.mxu0 0.0
    %215 = vmatprep.mubr.f32.mxu0 0.0
    %216 = vmatmul.mubr.f32.gmra.mxu0 %v58
    %v217 = vpop.f32.mrf.mxu0
    %v218 = vadd.f32 %v149, %v217
    %v219 = vpop.f32.mrf.mxu0
    %220 = vmatprep.mubr.f32.mxu0 0.0
    %221 = vmatmul.mubr.f32.gmra.mxu0 %v61
    %v222 = vpop.f32.mrf.mxu0
    %v223 = vadd.f32 %v149, %v222
    %v224 = vpop.f32.mrf.mxu0
    %225 = vdwg.mxu0
    %s226 = scalar_lea.vmem [#allocation5], 64
    %v227 = vld [vmem:[%s226] sm:$0xff]
    %v228 = vld [vmem:[%s226 + $0x8] sm:$0xff]
    %v229 = vld [vmem:[%s226 + $0x10] sm:$0xff]
    %v230 = vld [vmem:[%s226 + $0x18] sm:$0xff]
    %s231 = scalar_lea.vmem %s2, 2
    %v232 = vld [vmem:[%s231] sm:$0x1]
    %v234 = vlaneseq
    %v235 = vshrl.u32 %v234, 7
    %v236 = vsub.s32 0, %v235
    %v237 = vrot.slane %v232, %v236
    %239 = vmatprep.subr.mxu0 0.0
    %240 = vmatpush1.msra.mxu0 0.0
    %241 = vmatprep.subr.mxu0 0.0
    %242 = vmatpush1.msra.mxu0 0.0
    %243 = vmatprep.subr.mxu0 0.0
    %244 = vmatpush1.msra.mxu0 0.0
    %245 = vmatprep.subr.mxu0 0.0
    %246 = vmatpush1.msra.mxu0 0.0
    %247 = vmatprep.subr.mxu0 0.0
    %248 = vmatpush1.msra.mxu0 0.0
    %249 = vmatprep.subr.mxu0 0.0
    %250 = vmatpush1.msra.mxu0 0.0
    %251 = vmatprep.subr.mxu0 0.0
    %252 = vmatpush1.msra.mxu0 0.0
    %253 = vmatprep.subr.mxu0 0.0
    %254 = vmatpush1.msra.mxu0 0.0
    %255 = vmatprep.subr.mxu0 0.0
    %256 = vmatpush1.msra.mxu0 0.0
    %257 = vmatprep.subr.mxu0 0.0
    %258 = vmatpush1.msra.mxu0 0.0
    %259 = vmatprep.subr.mxu0 0.0
    %260 = vmatpush1.msra.mxu0 0.0
    %261 = vmatprep.subr.mxu0 0.0
    %262 = vmatpush1.msra.mxu0 0.0
    %263 = vmatprep.subr.mxu0 0.0
    %264 = vmatpush1.msra.mxu0 %v230
    %265 = vmatprep.subr.mxu0 0.0
    %266 = vmatpush1.msra.mxu0 %v229
    %267 = vmatprep.subr.mxu0 0.0
    %268 = vmatpush1.msra.mxu0 %v228
    %269 = vmatprep.subr.mxu0 0.0
    %270 = vmatpush1.msra.mxu0 %v227
    %271 = vmatprep.subr.mxu0 0.0
    %272 = vmatpush2.msra.mxu0 0.0
    %273 = vmatprep.subr.mxu0 0.0
    %274 = vmatpush2.msra.mxu0 0.0
    %275 = vmatprep.subr.mxu0 0.0
    %276 = vmatpush2.msra.mxu0 0.0
    %277 = vmatprep.subr.mxu0 0.0
    %278 = vmatpush2.msra.mxu0 0.0
    %279 = vmatprep.subr.mxu0 0.0
    %280 = vmatpush2.msra.mxu0 0.0
    %281 = vmatprep.subr.mxu0 0.0
    %282 = vmatpush2.msra.mxu0 0.0
    %283 = vmatprep.subr.mxu0 0.0
    %284 = vmatpush2.msra.mxu0 0.0
    %285 = vmatprep.subr.mxu0 0.0
    %286 = vmatpush2.msra.mxu0 0.0
    %287 = vmatprep.subr.mxu0 0.0
    %288 = vmatpush2.msra.mxu0 0.0
    %289 = vmatprep.subr.mxu0 0.0
    %290 = vmatpush2.msra.mxu0 0.0
    %291 = vmatprep.subr.mxu0 0.0
    %292 = vmatpush2.msra.mxu0 0.0
    %293 = vmatprep.subr.mxu0 0.0
    %294 = vmatpush2.msra.mxu0 0.0
    %295 = vmatprep.subr.mxu0 0.0
    %296 = vmatpush2.msra.mxu0 0.0
    %297 = vmatprep.subr.mxu0 0.0
    %298 = vmatpush2.msra.mxu0 0.0
    %299 = vmatprep.subr.mxu0 0.0
    %300 = vmatpush2.msra.mxu0 0.0
    %301 = vmatprep.subr.mxu0 0.0
    %302 = vmatpush2.msra.mxu0 0.0
    %303 = vmatprep.mubr.f32.mxu0 0.0
    %304 = vmatmul.mubr.f32.gmra.mxu0 %v58
    %v305 = vpop.f32.mrf.mxu0
    %v306 = vadd.f32 %v237, %v305
    %v307 = vpop.f32.mrf.mxu0
    %308 = vmatprep.mubr.f32.mxu0 0.0
    %309 = vmatmul.mubr.f32.gmra.mxu0 %v61
    %v310 = vpop.f32.mrf.mxu0
    %v311 = vadd.f32 %v237, %v310
    %v312 = vpop.f32.mrf.mxu0
    %313 = vdwg.mxu0
    %v314 = vmul.f32 %v130, %v218
    %v315 = vmul.f32 %v135, %v223
    %v316 = vadd.f32 %v314, %v306
    %v317 = vadd.f32 %v315, %v311
    %318 = vst [vmem:[#allocation7] sm:$0xff] %v316
    %319 = vst [vmem:[#allocation7 + $0x8] sm:$0xff] %v317
    // Predicated region
    $region22: #{tpu_custom_call.1} parent=1 // pred_check
      _
    $region23: #{tpu_custom_call.1} parent=1 // pred_check_branch
      %321 = sbr.rel (0) target = $region25
    $region24: #{tpu_custom_call.1} parent=1 // pred_region
      %s323 = ssub.s32 256, 256
      %324 = vsyncadd [#allocation4], %s323
      %s325 = sshll.u32 [#allocation7], 4
      %s326 = int_to_ptr.vmem [resolvable:$true] %s325
      %331 = dma.vmem_to_hbm [thread:$0]  %s326, 256, %s3, [#allocation4], 128, 128, 8
    $region25: #{tpu_custom_call.1} parent=1 // pred_fallthru
      _
    // Predicated region
    $region26: #{tpu_custom_call.1} parent=1 // pred_check
      _
    $region27: #{tpu_custom_call.1} parent=1 // pred_check_branch
      %333 = sbr.rel (0) target = $region29
    $region28: #{tpu_custom_call.1} parent=1 // pred_region
      %334 = dma.done [#allocation4], 256
    $region29: #{tpu_custom_call.1} parent=1 // pred_fallthru
      _
    %335 = vsyncpa [#allocation3], 1
    %336 = vsyncpa [#allocation6], 1
    %337 = vsyncpa [#allocation4], 1

</llo_original>
